<compile_context>
chip_gen: v7x
topology: tpu7x:2x2x1
jax: 0.10.0
libtpu: 0.0.40
codegen_flags: <defaults>
</compile_context>

<pallas_src>
import numpy as np
import jax
import jax.numpy as jnp
from jax.experimental import pallas as pl
from jax.experimental.pallas import tpu as pltpu


def _round_up(a, b):
    return ((a + b - 1) // b) * b


# ----------------------------------------------------------------------------
# Pallas kernel: per-edge-slot MLP (bf16 MXU, f32 accum) + padded segmented max.
# One grid step handles (tile_n nodes) x (tile_k neighbor slots).
# ----------------------------------------------------------------------------
def pointconv_kernel(ef_ref, w1_ref, b1_ref, w2_ref, b2_ref, out_ref):
    # ef_ref  : [tile_n, tile_k, cin_pad]  bf16 neighborhood features
    # w1_ref  : [cin_pad, H] bf16,  b1_ref: [1, H] f32
    # w2_ref  : [H, fout_pad] bf16, b2_ref: [1, fout_pad] f32
    # out_ref : [tile_n, fout_pad] f32  (running-max accumulator across K tiles)
    tn, tk, cin_p = ef_ref.shape
    fout_p = out_ref.shape[-1]
    k_tile = pl.program_id(1)

    # Per-edge MLP (bf16 MXU inputs, f32 accumulation). tk % 16 == 0 keeps the
    # leading-dim merge a layout no-op for bf16.
    ef = ef_ref[...].reshape(tn * tk, cin_p)
    h = jnp.dot(ef, w1_ref[...], preferred_element_type=jnp.float32)
    h = jnp.maximum(h + b1_ref[...], 0.0)                    # bias + ReLU in f32
    m = jnp.dot(h.astype(jnp.bfloat16), w2_ref[...],
                preferred_element_type=jnp.float32) + b2_ref[...]

    # Padded slots carry duplicate self-loop messages -> plain max is correct.
    tile_max = jnp.max(m.reshape(tn, tk, fout_p), axis=1)    # [tile_n, fout_pad]

    @pl.when(k_tile == 0)
    def _():
        out_ref[...] = tile_max

    @pl.when(k_tile > 0)
    def _():
        out_ref[...] = jnp.maximum(out_ref[...], tile_max)


def pointconv_forward(x, pos, batch, edge_index, w1, b1, w2, b2,
                      tile_n=256, tile_k=32):
    """Forward pass of PointConvNet2. Returns (x_out, pos, batch, edge_index)."""
    assert tile_n % 8 == 0 and tile_k % 16 == 0
    n_nodes, f_in = x.shape
    cin = f_in + pos.shape[1]
    h_dim = w1.shape[1]
    f_out = w2.shape[1]
    cin_pad = _round_up(cin, 16)
    fout_pad = _round_up(f_out, 128)

    # -------- host-side graph preprocessing: dense padded neighborhoods ------
    ei = np.asarray(jax.device_get(edge_index))
    src = ei[0].astype(np.int64)
    dst = ei[1].astype(np.int64)
    # add_self_loops=True (duplicates are harmless under max aggregation)
    loops = np.arange(n_nodes, dtype=np.int64)
    src = np.concatenate([src, loops])
    dst = np.concatenate([dst, loops])
    n_edges = src.shape[0]

    deg = np.bincount(dst, minlength=n_nodes).astype(np.int64)   # in-degree >= 1
    max_deg = int(deg.max())
    tile_k_eff = min(tile_k, _round_up(max_deg, 16))
    k_pad = _round_up(max_deg, tile_k_eff)
    tile_n_eff = min(tile_n, _round_up(n_nodes, 8))
    n_pad = _round_up(n_nodes, tile_n_eff)

    order = np.argsort(dst, kind="stable")
    sd, ss = dst[order], src[order]
    starts = np.zeros(n_nodes, np.int64)
    starts[1:] = np.cumsum(deg)[:-1]
    slot = np.arange(n_edges, dtype=np.int64) - starts[sd]       # rank in segment

    # Padded neighbor slots duplicate the node's own (self-loop) edge.
    nbr_src = np.tile((np.arange(n_pad, dtype=np.int64) % n_nodes)[:, None],
                      (1, k_pad)).astype(np.int32)
    nbr_src[sd, slot] = ss.astype(np.int32)
    nbr_src = jnp.asarray(nbr_src)                               # [n_pad, k_pad]

    # -------- gather + relative positions (XLA glue), compact bf16 ef --------
    # TODO(synk): fuse this gather into the kernel (scalar-prefetched nbr_src +
    # manual DMA gather) so ef never round-trips through HBM.
    pos_pad = jnp.pad(pos, ((0, n_pad - n_nodes), (0, 0)))
    x_j = x[nbr_src]                                             # [n_pad, k_pad, F_in]
    pos_j = pos[nbr_src]                                         # [n_pad, k_pad, 3]
    ef = jnp.concatenate([x_j, pos_j - pos_pad[:, None, :]], axis=-1)
    ef = jnp.pad(ef, ((0, 0), (0, 0), (0, cin_pad - cin))).astype(jnp.bfloat16)

    # -------- weights: bf16 MXU operands, f32 biases --------------------------
    w1p = jnp.zeros((cin_pad, h_dim), jnp.float32).at[:cin, :].set(
        jnp.asarray(w1, jnp.float32)).astype(jnp.bfloat16)
    b1p = jnp.asarray(b1, jnp.float32).reshape(1, h_dim)
    w2p = jnp.zeros((h_dim, fout_pad), jnp.float32).at[:, :f_out].set(
        jnp.asarray(w2, jnp.float32)).astype(jnp.bfloat16)
    b2p = jnp.zeros((1, fout_pad), jnp.float32).at[:, :f_out].set(
        jnp.asarray(b2, jnp.float32).reshape(1, f_out))

    grid = (n_pad // tile_n_eff, k_pad // tile_k_eff)   # (node blocks, K tiles)

    out_pad = pl.pallas_call(
        pointconv_kernel,
        out_shape=jax.ShapeDtypeStruct((n_pad, fout_pad), jnp.float32),
        grid=grid,
        in_specs=[
            pl.BlockSpec((tile_n_eff, tile_k_eff, cin_pad), lambda i, k: (i, k, 0)),
            pl.BlockSpec((cin_pad, h_dim), lambda i, k: (0, 0)),
            pl.BlockSpec((1, h_dim), lambda i, k: (0, 0)),
            pl.BlockSpec((h_dim, fout_pad), lambda i, k: (0, 0)),
            pl.BlockSpec((1, fout_pad), lambda i, k: (0, 0)),
        ],
        out_specs=pl.BlockSpec((tile_n_eff, fout_pad), lambda i, k: (i, 0)),
        compiler_params=pltpu.CompilerParams(
            dimension_semantics=("parallel", "arbitrary"),  # node axis -> 2 TCs on v7x
            vmem_limit_bytes=40 * 1024 * 1024,              # > v5e 16 MiB default, < v7x cap
        ),
    )(ef, w1p, b1p, w2p, b2p)

    x_out = out_pad[:n_nodes, :f_out]
    return x_out, pos, batch, edge_index


# ----------------------------------------------------------------------------
# Pure-JAX reference (full f32, edge-list masked max, self loops included).
# ----------------------------------------------------------------------------
def pointconv_ref(x, pos, edge_index, w1, b1, w2, b2):
    n = x.shape[0]
    loops = jnp.arange(n, dtype=edge_index.dtype)
    src = jnp.concatenate([edge_index[0], loops])
    dst = jnp.concatenate([edge_index[1], loops])
    ef = jnp.concatenate([x[src], pos[src] - pos[dst]], axis=1)
    h = jnp.maximum(ef @ w1 + b1, 0.0)
    m = h @ w2 + b2
    mask = dst[None, :] == jnp.arange(n)[:, None]
    return jnp.max(jnp.where(mask[:, :, None], m[None], -jnp.inf), axis=1)


if __name__ == "__main__":
    key = jax.random.PRNGKey(0)
    k1, k2, k3, k4, k5, k6, k7 = jax.random.split(key, 7)

    # small shapes consistent with the module: N nodes, F_in node features,
    # 3-D positions, local_nn = MLP(F_in+3 -> H -> F_out)
    N, F_IN, H, F_OUT = 16, 4, 32, 8
    E0 = 32  # random edges

    x = jax.random.normal(k1, (N, F_IN), dtype=jnp.float32)
    pos = jax.random.normal(k2, (N, 3), dtype=jnp.float32)
    batch = jnp.zeros((N,), dtype=jnp.int32)

    # random graph + a star into node 0 (max in-degree > 16 so the multi-K-tile
    # running-max path is exercised) + explicit self loops.
    rand_src = jax.random.randint(k3, (E0,), 0, N)
    rand_dst = jax.random.randint(k4, (E0,), 0, N)
    star_src = jnp.arange(N, dtype=rand_src.dtype)
    star_dst = jnp.zeros((N,), dtype=rand_src.dtype)
    self_loops = jnp.arange(N, dtype=rand_src.dtype)
    edge_index = jnp.stack(
        [jnp.concatenate([rand_src, star_src, self_loops]),
         jnp.concatenate([rand_dst, star_dst, self_loops])],
        axis=0,
    )

    # deterministic "net" parameters (local_nn MLP weights)
    w1 = jax.random.normal(k5, (F_IN + 3, H), dtype=jnp.float32) * 0.1
    b1 = jax.random.normal(k6, (1, H), dtype=jnp.float32) * 0.01
    w2 = jax.random.normal(k7, (H, F_OUT), dtype=jnp.float32) * 0.1
    b2 = jnp.zeros((1, F_OUT), dtype=jnp.float32)

    ref = pointconv_ref(x, pos, edge_index, w1, b1, w2, b2)

    # Run once with production-default tiles (auto-shrunk to the tiny graph)...
    x_out, pos_out, batch_out, ei_out = pointconv_forward(
        x, pos, batch, edge_index, w1, b1, w2, b2)
    jax.block_until_ready(x_out)
    err1 = float(jnp.max(jnp.abs(x_out - ref)))
    assert jnp.allclose(x_out, ref, atol=2e-2, rtol=2e-2), (
        f"default-tile mismatch vs reference, max abs err {err1}")

    # ...and once with small tiles to exercise the multi-block node axis and the
    # multi-K-tile running-max accumulator path.
    x_out2, _, _, _ = pointconv_forward(
        x, pos, batch, edge_index, w1, b1, w2, b2, tile_n=8, tile_k=16)
    jax.block_until_ready(x_out2)
    err2 = float(jnp.max(jnp.abs(x_out2 - ref)))
    assert jnp.allclose(x_out2, ref, atol=2e-2, rtol=2e-2), (
        f"small-tile mismatch vs reference, max abs err {err2}")

    print("KERNEL_OK")
</pallas_src>

<mosaic_0001>
module attributes {stable_mosaic.version = 11 : i64} {
  func.func @pointconv_kernel(%arg0: i32, %arg1: i32, %arg2: memref<16x32x16xbf16, #tpu.memory_space<vmem>>, %arg3: memref<16x32xbf16, #tpu.memory_space<vmem>>, %arg4: memref<1x32xf32, #tpu.memory_space<vmem>>, %arg5: memref<32x128xbf16, #tpu.memory_space<vmem>>, %arg6: memref<1x128xf32, #tpu.memory_space<vmem>>, %arg7: memref<16x128xf32, #tpu.memory_space<vmem>>) attributes {dimension_semantics = [#tpu.dimension_semantics<parallel>, #tpu.dimension_semantics<arbitrary>], iteration_bounds = array<i64: 1, 1>, scalar_prefetch = 0 : i64, scratch_operands = 0 : i64, tpu.core_type = #tpu.core_type<tc>, window_params = [{transform_indices = @transform_0, window_bounds = array<i64: 16, 32, 16>}, {pipeline_mode = #tpu.pipeline_mode<synchronous>, transform_indices = @transform_1, window_bounds = array<i64: 16, 32>}, {pipeline_mode = #tpu.pipeline_mode<synchronous>, transform_indices = @transform_2, window_bounds = array<i64: 1, 32>}, {pipeline_mode = #tpu.pipeline_mode<synchronous>, transform_indices = @transform_3, window_bounds = array<i64: 32, 128>}, {pipeline_mode = #tpu.pipeline_mode<synchronous>, transform_indices = @transform_4, window_bounds = array<i64: 1, 128>}, {transform_indices = @transform_5, window_bounds = array<i64: 16, 128>}]} {
    %c0 = arith.constant 0 : index
    %c0_0 = arith.constant 0 : index
    %c0_1 = arith.constant 0 : index
    %0 = vector.load %arg2[%c0, %c0_0, %c0_1] : memref<16x32x16xbf16, #tpu.memory_space<vmem>>, vector<16x32x16xbf16>
    %1 = vector.shape_cast %0 : vector<16x32x16xbf16> to vector<512x16xbf16>
    %c0_2 = arith.constant 0 : index
    %c0_3 = arith.constant 0 : index
    %2 = vector.load %arg3[%c0_2, %c0_3] : memref<16x32xbf16, #tpu.memory_space<vmem>>, vector<16x32xbf16>
    %cst = arith.constant dense<0.000000e+00> : vector<512x32xf32>
    %3 = tpu.matmul %1, %2, %cst {dimension_numbers = #tpu.dot_dimension_numbers<[1], [0], [0], [1], [0, 0, 1, 1], [], []>} : vector<512x16xbf16>, vector<16x32xbf16>, vector<512x32xf32> -> vector<512x32xf32>
    %c0_4 = arith.constant 0 : index
    %c0_5 = arith.constant 0 : index
    %4 = vector.load %arg4[%c0_4, %c0_5] : memref<1x32xf32, #tpu.memory_space<vmem>>, vector<1x32xf32>
    %5 = vector.broadcast %4 : vector<1x32xf32> to vector<512x32xf32>
    %6 = arith.addf %3, %5 : vector<512x32xf32>
    %cst_6 = arith.constant 0.000000e+00 : f32
    %7 = vector.broadcast %cst_6 : f32 to vector<512x32xf32>
    %8 = arith.maximumf %6, %7 : vector<512x32xf32>
    %9 = arith.truncf %8 : vector<512x32xf32> to vector<512x32xbf16>
    %c0_7 = arith.constant 0 : index
    %c0_8 = arith.constant 0 : index
    %10 = vector.load %arg5[%c0_7, %c0_8] : memref<32x128xbf16, #tpu.memory_space<vmem>>, vector<32x128xbf16>
    %cst_9 = arith.constant dense<0.000000e+00> : vector<512x128xf32>
    %11 = tpu.matmul %9, %10, %cst_9 {dimension_numbers = #tpu.dot_dimension_numbers<[1], [0], [0], [1], [0, 0, 1, 1], [], []>} : vector<512x32xbf16>, vector<32x128xbf16>, vector<512x128xf32> -> vector<512x128xf32>
    %c0_10 = arith.constant 0 : index
    %c0_11 = arith.constant 0 : index
    %12 = vector.load %arg6[%c0_10, %c0_11] : memref<1x128xf32, #tpu.memory_space<vmem>>, vector<1x128xf32>
    %13 = vector.broadcast %12 : vector<1x128xf32> to vector<512x128xf32>
    %14 = arith.addf %11, %13 : vector<512x128xf32>
    %15 = vector.shape_cast %14 : vector<512x128xf32> to vector<16x32x128xf32>
    %cst_12 = arith.constant dense<0xFF800000> : vector<16x128xf32>
    %16 = vector.multi_reduction <maximumf>, %15, %cst_12 [1] : vector<16x32x128xf32> to vector<16x128xf32>
    %c0_i32 = arith.constant 0 : i32
    %17 = arith.cmpi eq, %arg1, %c0_i32 : i32
    %18 = arith.extui %17 : i1 to i32
    %c0_i32_13 = arith.constant 0 : i32
    %19 = arith.cmpi ne, %18, %c0_i32_13 : i32
    scf.if %19 {
      %c0_16 = arith.constant 0 : index
      %c0_17 = arith.constant 0 : index
      %23 = vector.load %arg7[%c0_16, %c0_17] : memref<16x128xf32, #tpu.memory_space<vmem>>, vector<16x128xf32>
      tpu.vector_store %arg7[%c0_16, %c0_17], %16 {strides = array<i32>} : memref<16x128xf32, #tpu.memory_space<vmem>>, vector<16x128xf32>,
    } else {
    }
    %c0_i32_14 = arith.constant 0 : i32
    %20 = arith.cmpi sgt, %arg1, %c0_i32_14 : i32
    %21 = arith.extui %20 : i1 to i32
    %c0_i32_15 = arith.constant 0 : i32
    %22 = arith.cmpi ne, %21, %c0_i32_15 : i32
    scf.if %22 {
      %c0_16 = arith.constant 0 : index
      %c0_17 = arith.constant 0 : index
      %23 = vector.load %arg7[%c0_16, %c0_17] : memref<16x128xf32, #tpu.memory_space<vmem>>, vector<16x128xf32>
      %24 = arith.maximumf %23, %16 : vector<16x128xf32>
      %c0_18 = arith.constant 0 : index
      %c0_19 = arith.constant 0 : index
      %25 = vector.load %arg7[%c0_18, %c0_19] : memref<16x128xf32, #tpu.memory_space<vmem>>, vector<16x128xf32>
      tpu.vector_store %arg7[%c0_18, %c0_19], %24 {strides = array<i32>} : memref<16x128xf32, #tpu.memory_space<vmem>>, vector<16x128xf32>,
    } else {
    }
    return
  }
  func.func @transform_0(%arg0: i32, %arg1: i32) -> (i32, i32, i32) {
    %c0_i32 = arith.constant 0 : i32
    %c0_i32_0 = arith.constant 0 : i32
    return %arg0, %arg1, %c0_i32 : i32, i32, i32
  }
  func.func @transform_1(%arg0: i32, %arg1: i32) -> (i32, i32) {
    %c0_i32 = arith.constant 0 : i32
    %c0_i32_0 = arith.constant 0 : i32
    %c0_i32_1 = arith.constant 0 : i32
    return %c0_i32, %c0_i32_0 : i32, i32
  }
  func.func @transform_2(%arg0: i32, %arg1: i32) -> (i32, i32) {
    %c0_i32 = arith.constant 0 : i32
    %c0_i32_0 = arith.constant 0 : i32
    %c0_i32_1 = arith.constant 0 : i32
    return %c0_i32, %c0_i32_0 : i32, i32
  }
  func.func @transform_3(%arg0: i32, %arg1: i32) -> (i32, i32) {
    %c0_i32 = arith.constant 0 : i32
    %c0_i32_0 = arith.constant 0 : i32
    %c0_i32_1 = arith.constant 0 : i32
    return %c0_i32, %c0_i32_0 : i32, i32
  }
  func.func @transform_4(%arg0: i32, %arg1: i32) -> (i32, i32) {
    %c0_i32 = arith.constant 0 : i32
    %c0_i32_0 = arith.constant 0 : i32
    %c0_i32_1 = arith.constant 0 : i32
    return %c0_i32, %c0_i32_0 : i32, i32
  }
  func.func @transform_5(%arg0: i32, %arg1: i32) -> (i32, i32) {
    %c0_i32 = arith.constant 0 : i32
    %c0_i32_0 = arith.constant 0 : i32
    return %arg0, %c0_i32 : i32, i32
  }
}

</mosaic_0001>

<llo_original>
// kernel: tpu_custom_call.1
$region0: #{tpu_custom_call.1}
  #allocation0 [shape = 'u32[]', space=smem, size = 0x4, offset = 0x4, fixed_abs, tag = 'smem constant byte address 0x4 - core index']
  #allocation1 [shape = 'u32[144,128]{1,0:T(1,128)}', space=vmem, size = 0x12000, scoped, tag = 'internal scratch']
  %s0 = inlined_call_operand.vmem [shape: bf16[16,32,16], index: 0, kind: input, shape index: {}]
  %s1 = inlined_call_operand.vmem [shape: bf16[16,32], index: 1, kind: input, shape index: {}]
  %s2 = inlined_call_operand.vmem [shape: f32[1,32], index: 2, kind: input, shape index: {}]
  %s3 = inlined_call_operand.vmem [shape: bf16[32,128], index: 3, kind: input, shape index: {}]
  %s4 = inlined_call_operand.vmem [shape: f32[1,128], index: 4, kind: input, shape index: {}]
  %s5 = inlined_call_operand.hbm [shape: f32[16,128], index: 5, kind: output, shape index: {}]
  %s6 = sld [smem:[#allocation0]]
  $region38: #{tpu_custom_call.1} parent=0
    _
  %s8 = ssub.s32 1, %s6
  %s9 = scalar_select 0, %s8, %s6
  $region1: #{tpu_custom_call.1} parent=0
    #allocation2 [shape = 'u8[8192]{0}', space=vmem, size = 0x2000, scoped, tag = 'output window, operand 0, single buffered']
    #allocation3 [shape = 's32[1]{0}', space=sflag, size = 0x4, scoped, tag = 'scoped memory for tpu_custom_call.1']
    %10 = vsyncpa [#allocation3], 0
    // Predicated region
    $region2: #{tpu_custom_call.1} parent=1 // pred_check
      _
    $region3: #{tpu_custom_call.1} parent=1 // pred_check_branch
      %12 = sbr.rel (0) target = $region5
    $region4: #{tpu_custom_call.1} parent=1 // pred_region
      _
    $region5: #{tpu_custom_call.1} parent=1 // pred_fallthru
      _
    // Predicated region
    $region6: #{tpu_custom_call.1} parent=1 // pred_check
      _
    $region7: #{tpu_custom_call.1} parent=1 // pred_check_branch
      %14 = sbr.rel (0) target = $region9
    $region8: #{tpu_custom_call.1} parent=1 // pred_region
      _
    $region9: #{tpu_custom_call.1} parent=1 // pred_fallthru
      _
    // Predicated region
    $region10: #{tpu_custom_call.1} parent=1 // pred_check
      _
    $region11: #{tpu_custom_call.1} parent=1 // pred_check_branch
      %16 = sbr.rel (0) target = $region13
    $region12: #{tpu_custom_call.1} parent=1 // pred_region
      _
    $region13: #{tpu_custom_call.1} parent=1 // pred_fallthru
      _
    // Predicated region
    $region14: #{tpu_custom_call.1} parent=1 // pred_check
      _
    $region15: #{tpu_custom_call.1} parent=1 // pred_check_branch
      %18 = sbr.rel (0) target = $region17
    $region16: #{tpu_custom_call.1} parent=1 // pred_region
      _
    $region17: #{tpu_custom_call.1} parent=1 // pred_fallthru
      _
    // Predicated region
    $region18: #{tpu_custom_call.1} parent=1 // pred_check
      _
    $region19: #{tpu_custom_call.1} parent=1 // pred_check_branch
      %20 = sbr.rel (0) target = $region21
    $region20: #{tpu_custom_call.1} parent=1 // pred_region
      _
    $region21: #{tpu_custom_call.1} parent=1 // pred_fallthru
      _
    %v22 = vld [vmem:[%s0] sm:$0xf]
    %v23 = vld [vmem:[%s0 + $0x4] sm:$0xf]
    %v24 = vld [vmem:[%s0 + $0x8] sm:$0xf]
    %v25 = vld [vmem:[%s0 + $0xc] sm:$0xf]
    %v26 = vld [vmem:[%s0 + $0x10] sm:$0xf]
    %v27 = vld [vmem:[%s0 + $0x14] sm:$0xf]
    %v28 = vld [vmem:[%s0 + $0x18] sm:$0xf]
    %v29 = vld [vmem:[%s0 + $0x1c] sm:$0xf]
    %v30 = vld [vmem:[%s0 + $0x20] sm:$0xf]
    %v31 = vld [vmem:[%s0 + $0x24] sm:$0xf]
    %v32 = vld [vmem:[%s0 + $0x28] sm:$0xf]
    %v33 = vld [vmem:[%s0 + $0x2c] sm:$0xf]
    %v34 = vld [vmem:[%s0 + $0x30] sm:$0xf]
    %v35 = vld [vmem:[%s0 + $0x34] sm:$0xf]
    %v36 = vld [vmem:[%s0 + $0x38] sm:$0xf]
    %v37 = vld [vmem:[%s0 + $0x3c] sm:$0xf]
    %v38 = vld [vmem:[%s0 + $0x40] sm:$0xf]
    %v39 = vld [vmem:[%s0 + $0x44] sm:$0xf]
    %v40 = vld [vmem:[%s0 + $0x48] sm:$0xf]
    %v41 = vld [vmem:[%s0 + $0x4c] sm:$0xf]
    %v42 = vld [vmem:[%s0 + $0x50] sm:$0xf]
    %v43 = vld [vmem:[%s0 + $0x54] sm:$0xf]
    %v44 = vld [vmem:[%s0 + $0x58] sm:$0xf]
    %v45 = vld [vmem:[%s0 + $0x5c] sm:$0xf]
    %v46 = vld [vmem:[%s0 + $0x60] sm:$0xf]
    %v47 = vld [vmem:[%s0 + $0x64] sm:$0xf]
    %v48 = vld [vmem:[%s0 + $0x68] sm:$0xf]
    %v49 = vld [vmem:[%s0 + $0x6c] sm:$0xf]
    %v50 = vld [vmem:[%s0 + $0x70] sm:$0xf]
    %v51 = vld [vmem:[%s0 + $0x74] sm:$0xf]
    %v52 = vld [vmem:[%s0 + $0x78] sm:$0xf]
    %v53 = vld [vmem:[%s0 + $0x7c] sm:$0xf]
    %v54 = vld [vmem:[%s0 + $0x80] sm:$0xf]
    %v55 = vld [vmem:[%s0 + $0x84] sm:$0xf]
    %v56 = vld [vmem:[%s0 + $0x88] sm:$0xf]
    %v57 = vld [vmem:[%s0 + $0x8c] sm:$0xf]
    %v58 = vld [vmem:[%s0 + $0x90] sm:$0xf]
    %v59 = vld [vmem:[%s0 + $0x94] sm:$0xf]
    %v60 = vld [vmem:[%s0 + $0x98] sm:$0xf]
    %v61 = vld [vmem:[%s0 + $0x9c] sm:$0xf]
    %v62 = vld [vmem:[%s0 + $0xa0] sm:$0xf]
    %v63 = vld [vmem:[%s0 + $0xa4] sm:$0xf]
    %v64 = vld [vmem:[%s0 + $0xa8] sm:$0xf]
    %v65 = vld [vmem:[%s0 + $0xac] sm:$0xf]
    %v66 = vld [vmem:[%s0 + $0xb0] sm:$0xf]
    %v67 = vld [vmem:[%s0 + $0xb4] sm:$0xf]
    %v68 = vld [vmem:[%s0 + $0xb8] sm:$0xf]
    %v69 = vld [vmem:[%s0 + $0xbc] sm:$0xf]
    %v70 = vld [vmem:[%s0 + $0xc0] sm:$0xf]
    %v71 = vld [vmem:[%s0 + $0xc4] sm:$0xf]
    %v72 = vld [vmem:[%s0 + $0xc8] sm:$0xf]
    %v73 = vld [vmem:[%s0 + $0xcc] sm:$0xf]
    %v74 = vld [vmem:[%s0 + $0xd0] sm:$0xf]
    %v75 = vld [vmem:[%s0 + $0xd4] sm:$0xf]
    %v76 = vld [vmem:[%s0 + $0xd8] sm:$0xf]
    %v77 = vld [vmem:[%s0 + $0xdc] sm:$0xf]
    %v78 = vld [vmem:[%s0 + $0xe0] sm:$0xf]
    %v79 = vld [vmem:[%s0 + $0xe4] sm:$0xf]
    %v80 = vld [vmem:[%s0 + $0xe8] sm:$0xf]
    %v81 = vld [vmem:[%s0 + $0xec] sm:$0xf]
    %v82 = vld [vmem:[%s0 + $0xf0] sm:$0xf]
    %v83 = vld [vmem:[%s0 + $0xf4] sm:$0xf]
    %v84 = vld [vmem:[%s0 + $0xf8] sm:$0xf]
    %v85 = vld [vmem:[%s0 + $0xfc] sm:$0xf]
    %v86 = vld [vmem:[%s1] sm:$0xf]
    %v87 = vld [vmem:[%s1 + $0x4] sm:$0xf]
    %v88 = vld [vmem:[%s2] sm:$0x1]
    %v90 = vlaneseq
    %v91 = vshrl.u32 %v90, 7
    %v92 = vsub.s32 0, %v91
    %v93 = vrot.slane %v88, %v92
    %v159 = vunpack.c.l.b16 %v22
    %v160 = vunpack.c.l.b16 %v23
    %v161 = vunpack.c.l.b16 %v24
    %v162 = vunpack.c.l.b16 %v25
    %v163 = vunpack.c.l.b16 %v26
    %v164 = vunpack.c.l.b16 %v27
    %v165 = vunpack.c.l.b16 %v28
    %v166 = vunpack.c.l.b16 %v29
    %v167 = vunpack.c.l.b16 %v30
    %v168 = vunpack.c.l.b16 %v31
    %v169 = vunpack.c.l.b16 %v32
    %v170 = vunpack.c.l.b16 %v33
    %v171 = vunpack.c.l.b16 %v34
    %v172 = vunpack.c.l.b16 %v35
    %v173 = vunpack.c.l.b16 %v36
    %v174 = vunpack.c.l.b16 %v37
    %v175 = vunpack.c.l.b16 %v38
    %v176 = vunpack.c.l.b16 %v39
    %v177 = vunpack.c.l.b16 %v40
    %v178 = vunpack.c.l.b16 %v41
    %v179 = vunpack.c.l.b16 %v42
    %v180 = vunpack.c.l.b16 %v43
    %v181 = vunpack.c.l.b16 %v44
    %v182 = vunpack.c.l.b16 %v45
    %v183 = vunpack.c.l.b16 %v46
    %v184 = vunpack.c.l.b16 %v47
    %v185 = vunpack.c.l.b16 %v48
    %v186 = vunpack.c.l.b16 %v49
    %v187 = vunpack.c.l.b16 %v50
    %v188 = vunpack.c.l.b16 %v51
    %v189 = vunpack.c.l.b16 %v52
    %v190 = vunpack.c.l.b16 %v53
    %v191 = vunpack.c.l.b16 %v54
    %v192 = vunpack.c.l.b16 %v55
    %v193 = vunpack.c.l.b16 %v56
    %v194 = vunpack.c.l.b16 %v57
    %v195 = vunpack.c.l.b16 %v58
    %v196 = vunpack.c.l.b16 %v59
    %v197 = vunpack.c.l.b16 %v60
    %v198 = vunpack.c.l.b16 %v61
    %v199 = vunpack.c.l.b16 %v62
    %v200 = vunpack.c.l.b16 %v63
    %v201 = vunpack.c.l.b16 %v64
    %v202 = vunpack.c.l.b16 %v65
    %v203 = vunpack.c.l.b16 %v66
    %v204 = vunpack.c.l.b16 %v67
    %v205 = vunpack.c.l.b16 %v68
    %v206 = vunpack.c.l.b16 %v69
    %v207 = vunpack.c.l.b16 %v70
    %v208 = vunpack.c.l.b16 %v71
    %v209 = vunpack.c.l.b16 %v72
    %v210 = vunpack.c.l.b16 %v73
    %v211 = vunpack.c.l.b16 %v74
    %v212 = vunpack.c.l.b16 %v75
    %v213 = vunpack.c.l.b16 %v76
    %v214 = vunpack.c.l.b16 %v77
    %v215 = vunpack.c.l.b16 %v78
    %v216 = vunpack.c.l.b16 %v79
    %v217 = vunpack.c.l.b16 %v80
    %v218 = vunpack.c.l.b16 %v81
    %v219 = vunpack.c.l.b16 %v82
    %v220 = vunpack.c.l.b16 %v83
    %v221 = vunpack.c.l.b16 %v84
    %v222 = vunpack.c.l.b16 %v85
    %v223 = vpack.c.b16 %v160, %v159
    %v224 = vpack.c.b16 %v162, %v161
    %v225 = vpack.c.b16 %v164, %v163
    %v226 = vpack.c.b16 %v166, %v165
    %v227 = vpack.c.b16 %v168, %v167
    %v228 = vpack.c.b16 %v170, %v169
    %v229 = vpack.c.b16 %v172, %v171
    %v230 = vpack.c.b16 %v174, %v173
    %v231 = vpack.c.b16 %v176, %v175
    %v232 = vpack.c.b16 %v178, %v177
    %v233 = vpack.c.b16 %v180, %v179
    %v234 = vpack.c.b16 %v182, %v181
    %v235 = vpack.c.b16 %v184, %v183
    %v236 = vpack.c.b16 %v186, %v185
    %v237 = vpack.c.b16 %v188, %v187
    %v238 = vpack.c.b16 %v190, %v189
    %v239 = vpack.c.b16 %v192, %v191
    %v240 = vpack.c.b16 %v194, %v193
    %v241 = vpack.c.b16 %v196, %v195
    %v242 = vpack.c.b16 %v198, %v197
    %v243 = vpack.c.b16 %v200, %v199
    %v244 = vpack.c.b16 %v202, %v201
    %v245 = vpack.c.b16 %v204, %v203
    %v246 = vpack.c.b16 %v206, %v205
    %v247 = vpack.c.b16 %v208, %v207
    %v248 = vpack.c.b16 %v210, %v209
    %v249 = vpack.c.b16 %v212, %v211
    %v250 = vpack.c.b16 %v214, %v213
    %v251 = vpack.c.b16 %v216, %v215
    %v252 = vpack.c.b16 %v218, %v217
    %v253 = vpack.c.b16 %v220, %v219
    %v254 = vpack.c.b16 %v222, %v221
    %v257 = vunpack.c.l.b16 %v86
    %v258 = vunpack.c.l.b16 %v87
    %v259 = vpack.c.b16 %v258, %v257
    %vm261 = vcmask 130048
    %v263 = vsel %vm261, %v223, 0
    %v266 = vsel %vm261, %v224, 0
    %v269 = vsel %vm261, %v225, 0
    %v272 = vsel %vm261, %v226, 0
    %v275 = vsel %vm261, %v227, 0
    %v278 = vsel %vm261, %v228, 0
    %v281 = vsel %vm261, %v229, 0
    %v284 = vsel %vm261, %v230, 0
    %v287 = vsel %vm261, %v231, 0
    %v290 = vsel %vm261, %v232, 0
    %v293 = vsel %vm261, %v233, 0
    %v296 = vsel %vm261, %v234, 0
    %v299 = vsel %vm261, %v235, 0
    %v302 = vsel %vm261, %v236, 0
    %v305 = vsel %vm261, %v237, 0
    %v308 = vsel %vm261, %v238, 0
    %v311 = vsel %vm261, %v239, 0
    %v314 = vsel %vm261, %v240, 0
    %v317 = vsel %vm261, %v241, 0
    %v320 = vsel %vm261, %v242, 0
    %v323 = vsel %vm261, %v243, 0
    %v326 = vsel %vm261, %v244, 0
    %v329 = vsel %vm261, %v245, 0
    %v332 = vsel %vm261, %v246, 0
    %v335 = vsel %vm261, %v247, 0
    %v338 = vsel %vm261, %v248, 0
    %v341 = vsel %vm261, %v249, 0
    %v344 = vsel %vm261, %v250, 0
    %v347 = vsel %vm261, %v251, 0
    %v350 = vsel %vm261, %v252, 0
    %v353 = vsel %vm261, %v253, 0
    %v356 = vsel %vm261, %v254, 0
    %358 = vmatprep.subr.bf16.mxu0 0
    %359 = vmatpush1.bf16.msra.mxu0 %v259
    %360 = vmatprep.subr.bf16.mxu0 0
    %361 = vmatpush1.bf16.msra.mxu0 0
    %362 = vmatprep.subr.bf16.mxu0 0
    %363 = vmatpush1.bf16.msra.mxu0 0
    %364 = vmatprep.subr.bf16.mxu0 0
    %365 = vmatpush1.bf16.msra.mxu0 0
    %366 = vmatprep.subr.bf16.mxu0 0
    %367 = vmatpush1.bf16.msra.mxu0 0
    %368 = vmatprep.subr.bf16.mxu0 0
    %369 = vmatpush1.bf16.msra.mxu0 0
    %370 = vmatprep.subr.bf16.mxu0 0
    %371 = vmatpush1.bf16.msra.mxu0 0
    %372 = vmatprep.subr.bf16.mxu0 0
    %373 = vmatpush1.bf16.msra.mxu0 0
    %374 = vmatprep.subr.bf16.mxu0 0
    %375 = vmatpush1.bf16.msra.mxu0 0
    %376 = vmatprep.subr.bf16.mxu0 0
    %377 = vmatpush1.bf16.msra.mxu0 0
    %378 = vmatprep.subr.bf16.mxu0 0
    %379 = vmatpush1.bf16.msra.mxu0 0
    %380 = vmatprep.subr.bf16.mxu0 0
    %381 = vmatpush1.bf16.msra.mxu0 0
    %382 = vmatprep.subr.bf16.mxu0 0
    %383 = vmatpush1.bf16.msra.mxu0 0
    %384 = vmatprep.subr.bf16.mxu0 0
    %385 = vmatpush1.bf16.msra.mxu0 0
    %386 = vmatprep.subr.bf16.mxu0 0
    %387 = vmatpush1.bf16.msra.mxu0 0
    %388 = vmatprep.subr.bf16.mxu0 0
    %389 = vmatpush1.bf16.msra.mxu0 0
    %390 = vmatprep.mubr.bf16.mxu0 0
    %391 = vmatmul.mubr.bf16.gmra.mrb[0].mxu0 %v263
    %v392 = vpop.f32.mrb[0].mxu0
    %v393 = vadd.f32 %v93, %v392
    %v394 = vpop.f32.mrb[0].mxu0
    %v395 = vpop.f32.mrb[0].mxu0
    %v396 = vadd.f32 %v93, %v395
    %v397 = vpop.f32.mrb[0].mxu0
    %398 = vmatprep.mubr.bf16.mxu0 0
    %399 = vmatmul.mubr.bf16.gmra.mrb[0].mxu0 %v266
    %v400 = vpop.f32.mrb[0].mxu0
    %v401 = vadd.f32 %v93, %v400
    %v402 = vpop.f32.mrb[0].mxu0
    %v403 = vpop.f32.mrb[0].mxu0
    %v404 = vadd.f32 %v93, %v403
    %v405 = vpop.f32.mrb[0].mxu0
    %406 = vmatprep.mubr.bf16.mxu0 0
    %407 = vmatmul.mubr.bf16.gmra.mrb[0].mxu0 %v269
    %v408 = vpop.f32.mrb[0].mxu0
    %v409 = vadd.f32 %v93, %v408
    %v410 = vpop.f32.mrb[0].mxu0
    %v411 = vpop.f32.mrb[0].mxu0
    %v412 = vadd.f32 %v93, %v411
    %v413 = vpop.f32.mrb[0].mxu0
    %414 = vmatprep.mubr.bf16.mxu0 0
    %415 = vmatmul.mubr.bf16.gmra.mrb[0].mxu0 %v272
    %v416 = vpop.f32.mrb[0].mxu0
    %v417 = vadd.f32 %v93, %v416
    %v418 = vpop.f32.mrb[0].mxu0
    %v419 = vpop.f32.mrb[0].mxu0
    %v420 = vadd.f32 %v93, %v419
    %v421 = vpop.f32.mrb[0].mxu0
    %422 = vmatprep.mubr.bf16.mxu0 0
    %423 = vmatmul.mubr.bf16.gmra.mrb[0].mxu0 %v275
    %v424 = vpop.f32.mrb[0].mxu0
    %v425 = vadd.f32 %v93, %v424
    %v426 = vpop.f32.mrb[0].mxu0
    %v427 = vpop.f32.mrb[0].mxu0
    %v428 = vadd.f32 %v93, %v427
    %v429 = vpop.f32.mrb[0].mxu0
    %430 = vmatprep.mubr.bf16.mxu0 0
    %431 = vmatmul.mubr.bf16.gmra.mrb[0].mxu0 %v278
    %v432 = vpop.f32.mrb[0].mxu0
    %v433 = vadd.f32 %v93, %v432
    %v434 = vpop.f32.mrb[0].mxu0
    %v435 = vpop.f32.mrb[0].mxu0
    %v436 = vadd.f32 %v93, %v435
    %v437 = vpop.f32.mrb[0].mxu0
    %438 = vmatprep.mubr.bf16.mxu0 0
    %439 = vmatmul.mubr.bf16.gmra.mrb[0].mxu0 %v281
    %v440 = vpop.f32.mrb[0].mxu0
    %v441 = vadd.f32 %v93, %v440
    %v442 = vpop.f32.mrb[0].mxu0
    %v443 = vpop.f32.mrb[0].mxu0
    %v444 = vadd.f32 %v93, %v443
    %v445 = vpop.f32.mrb[0].mxu0
    %446 = vmatprep.mubr.bf16.mxu0 0
    %447 = vmatmul.mubr.bf16.gmra.mrb[0].mxu0 %v284
    %v448 = vpop.f32.mrb[0].mxu0
    %v449 = vadd.f32 %v93, %v448
    %v450 = vpop.f32.mrb[0].mxu0
    %v451 = vpop.f32.mrb[0].mxu0
    %v452 = vadd.f32 %v93, %v451
    %v453 = vpop.f32.mrb[0].mxu0
    %454 = vmatprep.mubr.bf16.mxu0 0
    %455 = vmatmul.mubr.bf16.gmra.mrb[0].mxu0 %v287
    %v456 = vpop.f32.mrb[0].mxu0
    %v457 = vadd.f32 %v93, %v456
    %v458 = vpop.f32.mrb[0].mxu0
    %v459 = vpop.f32.mrb[0].mxu0
    %v460 = vadd.f32 %v93, %v459
    %v461 = vpop.f32.mrb[0].mxu0
    %462 = vmatprep.mubr.bf16.mxu0 0
    %463 = vmatmul.mubr.bf16.gmra.mrb[0].mxu0 %v290
    %v464 = vpop.f32.mrb[0].mxu0
    %v465 = vadd.f32 %v93, %v464
    %v466 = vpop.f32.mrb[0].mxu0
    %v467 = vpop.f32.mrb[0].mxu0
    %v468 = vadd.f32 %v93, %v467
    %v469 = vpop.f32.mrb[0].mxu0
    %470 = vmatprep.mubr.bf16.mxu0 0
    %471 = vmatmul.mubr.bf16.gmra.mrb[0].mxu0 %v293
    %v472 = vpop.f32.mrb[0].mxu0
    %v473 = vadd.f32 %v93, %v472
    %v474 = vpop.f32.mrb[0].mxu0
    %v475 = vpop.f32.mrb[0].mxu0
    %v476 = vadd.f32 %v93, %v475
    %v477 = vpop.f32.mrb[0].mxu0
    %478 = vmatprep.mubr.bf16.mxu0 0
    %479 = vmatmul.mubr.bf16.gmra.mrb[0].mxu0 %v296
    %v480 = vpop.f32.mrb[0].mxu0
    %v481 = vadd.f32 %v93, %v480
    %v482 = vpop.f32.mrb[0].mxu0
    %v483 = vpop.f32.mrb[0].mxu0
    %v484 = vadd.f32 %v93, %v483
    %v485 = vpop.f32.mrb[0].mxu0
    %486 = vmatprep.mubr.bf16.mxu0 0
    %487 = vmatmul.mubr.bf16.gmra.mrb[0].mxu0 %v299
    %v488 = vpop.f32.mrb[0].mxu0
    %v489 = vadd.f32 %v93, %v488
    %v490 = vpop.f32.mrb[0].mxu0
    %v491 = vpop.f32.mrb[0].mxu0
    %v492 = vadd.f32 %v93, %v491
    %v493 = vpop.f32.mrb[0].mxu0
    %494 = vmatprep.mubr.bf16.mxu0 0
    %495 = vmatmul.mubr.bf16.gmra.mrb[0].mxu0 %v302
    %v496 = vpop.f32.mrb[0].mxu0
    %v497 = vadd.f32 %v93, %v496
    %v498 = vpop.f32.mrb[0].mxu0
    %v499 = vpop.f32.mrb[0].mxu0
    %v500 = vadd.f32 %v93, %v499
    %v501 = vpop.f32.mrb[0].mxu0
    %502 = vmatprep.mubr.bf16.mxu0 0
    %503 = vmatmul.mubr.bf16.gmra.mrb[0].mxu0 %v305
    %v504 = vpop.f32.mrb[0].mxu0
    %v505 = vadd.f32 %v93, %v504
    %v506 = vpop.f32.mrb[0].mxu0
    %v507 = vpop.f32.mrb[0].mxu0
    %v508 = vadd.f32 %v93, %v507
    %v509 = vpop.f32.mrb[0].mxu0
    %510 = vmatprep.mubr.bf16.mxu0 0
    %511 = vmatmul.mubr.bf16.gmra.mrb[0].mxu0 %v308
    %v512 = vpop.f32.mrb[0].mxu0
    %v513 = vadd.f32 %v93, %v512
    %v514 = vpop.f32.mrb[0].mxu0
    %v515 = vpop.f32.mrb[0].mxu0
    %v516 = vadd.f32 %v93, %v515
    %v517 = vpop.f32.mrb[0].mxu0
    %518 = vmatprep.mubr.bf16.mxu0 0
    %519 = vmatmul.mubr.bf16.gmra.mrb[0].mxu0 %v311
    %v520 = vpop.f32.mrb[0].mxu0
    %v521 = vadd.f32 %v93, %v520
    %v522 = vpop.f32.mrb[0].mxu0
    %v523 = vpop.f32.mrb[0].mxu0
    %v524 = vadd.f32 %v93, %v523
    %v525 = vpop.f32.mrb[0].mxu0
    %526 = vmatprep.mubr.bf16.mxu0 0
    %527 = vmatmul.mubr.bf16.gmra.mrb[0].mxu0 %v314
    %v528 = vpop.f32.mrb[0].mxu0
    %v529 = vadd.f32 %v93, %v528
    %v530 = vpop.f32.mrb[0].mxu0
    %v531 = vpop.f32.mrb[0].mxu0
    %v532 = vadd.f32 %v93, %v531
    %v533 = vpop.f32.mrb[0].mxu0
    %534 = vmatprep.mubr.bf16.mxu0 0
    %535 = vmatmul.mubr.bf16.gmra.mrb[0].mxu0 %v317
    %v536 = vpop.f32.mrb[0].mxu0
    %v537 = vadd.f32 %v93, %v536
    %v538 = vpop.f32.mrb[0].mxu0
    %v539 = vpop.f32.mrb[0].mxu0
    %v540 = vadd.f32 %v93, %v539
    %v541 = vpop.f32.mrb[0].mxu0
    %542 = vmatprep.mubr.bf16.mxu0 0
    %543 = vmatmul.mubr.bf16.gmra.mrb[0].mxu0 %v320
    %v544 = vpop.f32.mrb[0].mxu0
    %v545 = vadd.f32 %v93, %v544
    %v546 = vpop.f32.mrb[0].mxu0
    %v547 = vpop.f32.mrb[0].mxu0
    %v548 = vadd.f32 %v93, %v547
    %v549 = vpop.f32.mrb[0].mxu0
    %550 = vmatprep.mubr.bf16.mxu0 0
    %551 = vmatmul.mubr.bf16.gmra.mrb[0].mxu0 %v323
    %v552 = vpop.f32.mrb[0].mxu0
    %v553 = vadd.f32 %v93, %v552
    %v554 = vpop.f32.mrb[0].mxu0
    %v555 = vpop.f32.mrb[0].mxu0
    %v556 = vadd.f32 %v93, %v555
    %v557 = vpop.f32.mrb[0].mxu0
    %558 = vmatprep.mubr.bf16.mxu0 0
    %559 = vmatmul.mubr.bf16.gmra.mrb[0].mxu0 %v326
    %v560 = vpop.f32.mrb[0].mxu0
    %v561 = vadd.f32 %v93, %v560
    %v562 = vpop.f32.mrb[0].mxu0
    %v563 = vpop.f32.mrb[0].mxu0
    %v564 = vadd.f32 %v93, %v563
    %v565 = vpop.f32.mrb[0].mxu0
    %566 = vmatprep.mubr.bf16.mxu0 0
    %567 = vmatmul.mubr.bf16.gmra.mrb[0].mxu0 %v329
    %v568 = vpop.f32.mrb[0].mxu0
    %v569 = vadd.f32 %v93, %v568
    %v570 = vpop.f32.mrb[0].mxu0
    %v571 = vpop.f32.mrb[0].mxu0
    %v572 = vadd.f32 %v93, %v571
    %v573 = vpop.f32.mrb[0].mxu0
    %574 = vmatprep.mubr.bf16.mxu0 0
    %575 = vmatmul.mubr.bf16.gmra.mrb[0].mxu0 %v332
    %v576 = vpop.f32.mrb[0].mxu0
    %v577 = vadd.f32 %v93, %v576
    %v578 = vpop.f32.mrb[0].mxu0
    %v579 = vpop.f32.mrb[0].mxu0
    %v580 = vadd.f32 %v93, %v579
    %v581 = vpop.f32.mrb[0].mxu0
    %582 = vmatprep.mubr.bf16.mxu0 0
    %583 = vmatmul.mubr.bf16.gmra.mrb[0].mxu0 %v335
    %v584 = vpop.f32.mrb[0].mxu0
    %v585 = vadd.f32 %v93, %v584
    %v586 = vpop.f32.mrb[0].mxu0
    %v587 = vpop.f32.mrb[0].mxu0
    %v588 = vadd.f32 %v93, %v587
    %v589 = vpop.f32.mrb[0].mxu0
    %590 = vmatprep.mubr.bf16.mxu0 0
    %591 = vmatmul.mubr.bf16.gmra.mrb[0].mxu0 %v338
    %v592 = vpop.f32.mrb[0].mxu0
    %v593 = vadd.f32 %v93, %v592
    %v594 = vpop.f32.mrb[0].mxu0
    %v595 = vpop.f32.mrb[0].mxu0
    %v596 = vadd.f32 %v93, %v595
    %v597 = vpop.f32.mrb[0].mxu0
    %598 = vmatprep.mubr.bf16.mxu0 0
    %599 = vmatmul.mubr.bf16.gmra.mrb[0].mxu0 %v341
    %v600 = vpop.f32.mrb[0].mxu0
    %v601 = vadd.f32 %v93, %v600
    %v602 = vpop.f32.mrb[0].mxu0
    %v603 = vpop.f32.mrb[0].mxu0
    %v604 = vadd.f32 %v93, %v603
    %v605 = vpop.f32.mrb[0].mxu0
    %606 = vmatprep.mubr.bf16.mxu0 0
    %607 = vmatmul.mubr.bf16.gmra.mrb[0].mxu0 %v344
    %v608 = vpop.f32.mrb[0].mxu0
    %v609 = vadd.f32 %v93, %v608
    %v610 = vpop.f32.mrb[0].mxu0
    %v611 = vpop.f32.mrb[0].mxu0
    %v612 = vadd.f32 %v93, %v611
    %v613 = vpop.f32.mrb[0].mxu0
    %614 = vmatprep.mubr.bf16.mxu0 0
    %615 = vmatmul.mubr.bf16.gmra.mrb[0].mxu0 %v347
    %v616 = vpop.f32.mrb[0].mxu0
    %v617 = vadd.f32 %v93, %v616
    %v618 = vpop.f32.mrb[0].mxu0
    %v619 = vpop.f32.mrb[0].mxu0
    %v620 = vadd.f32 %v93, %v619
    %v621 = vpop.f32.mrb[0].mxu0
    %622 = vmatprep.mubr.bf16.mxu0 0
    %623 = vmatmul.mubr.bf16.gmra.mrb[0].mxu0 %v350
    %v624 = vpop.f32.mrb[0].mxu0
    %v625 = vadd.f32 %v93, %v624
    %v626 = vpop.f32.mrb[0].mxu0
    %v627 = vpop.f32.mrb[0].mxu0
    %v628 = vadd.f32 %v93, %v627
    %v629 = vpop.f32.mrb[0].mxu0
    %630 = vmatprep.mubr.bf16.mxu0 0
    %631 = vmatmul.mubr.bf16.gmra.mrb[0].mxu0 %v353
    %v632 = vpop.f32.mrb[0].mxu0
    %v633 = vadd.f32 %v93, %v632
    %v634 = vpop.f32.mrb[0].mxu0
    %v635 = vpop.f32.mrb[0].mxu0
    %v636 = vadd.f32 %v93, %v635
    %v637 = vpop.f32.mrb[0].mxu0
    %638 = vmatprep.mubr.bf16.mxu0 0
    %639 = vmatmul.mubr.bf16.gmra.mrb[0].mxu0 %v356
    %v640 = vpop.f32.mrb[0].mxu0
    %v641 = vadd.f32 %v93, %v640
    %v642 = vpop.f32.mrb[0].mxu0
    %v643 = vpop.f32.mrb[0].mxu0
    %v644 = vadd.f32 %v93, %v643
    %v645 = vpop.f32.mrb[0].mxu0
    %646 = vdwg.mxu0
    %v647 = vmax.f32 %v393, 0.0
    %v648 = vmax.f32 %v396, 0.0
    %v649 = vmax.f32 %v401, 0.0
    %v650 = vmax.f32 %v404, 0.0
    %v651 = vmax.f32 %v409, 0.0
    %v652 = vmax.f32 %v412, 0.0
    %v653 = vmax.f32 %v417, 0.0
    %v654 = vmax.f32 %v420, 0.0
    %v655 = vmax.f32 %v425, 0.0
    %v656 = vmax.f32 %v428, 0.0
    %v657 = vmax.f32 %v433, 0.0
    %v658 = vmax.f32 %v436, 0.0
    %v659 = vmax.f32 %v441, 0.0
    %v660 = vmax.f32 %v444, 0.0
    %v661 = vmax.f32 %v449, 0.0
    %v662 = vmax.f32 %v452, 0.0
    %v663 = vmax.f32 %v457, 0.0
    %v664 = vmax.f32 %v460, 0.0
    %v665 = vmax.f32 %v465, 0.0
    %v666 = vmax.f32 %v468, 0.0
    %v667 = vmax.f32 %v473, 0.0
    %v668 = vmax.f32 %v476, 0.0
    %v669 = vmax.f32 %v481, 0.0
    %v670 = vmax.f32 %v484, 0.0
    %v671 = vmax.f32 %v489, 0.0
    %v672 = vmax.f32 %v492, 0.0
    %v673 = vmax.f32 %v497, 0.0
    %v674 = vmax.f32 %v500, 0.0
    %v675 = vmax.f32 %v505, 0.0
    %v676 = vmax.f32 %v508, 0.0
    %v677 = vmax.f32 %v513, 0.0
    %v678 = vmax.f32 %v516, 0.0
    %v679 = vmax.f32 %v521, 0.0
    %v680 = vmax.f32 %v524, 0.0
    %v681 = vmax.f32 %v529, 0.0
    %v682 = vmax.f32 %v532, 0.0
    %v683 = vmax.f32 %v537, 0.0
    %v684 = vmax.f32 %v540, 0.0
    %v685 = vmax.f32 %v545, 0.0
    %v686 = vmax.f32 %v548, 0.0
    %v687 = vmax.f32 %v553, 0.0
    %v688 = vmax.f32 %v556, 0.0
    %v689 = vmax.f32 %v561, 0.0
    %v690 = vmax.f32 %v564, 0.0
    %v691 = vmax.f32 %v569, 0.0
    %v692 = vmax.f32 %v572, 0.0
    %v693 = vmax.f32 %v577, 0.0
    %v694 = vmax.f32 %v580, 0.0
    %v695 = vmax.f32 %v585, 0.0
    %v696 = vmax.f32 %v588, 0.0
    %v697 = vmax.f32 %v593, 0.0
    %v698 = vmax.f32 %v596, 0.0
    %v699 = vmax.f32 %v601, 0.0
    %v700 = vmax.f32 %v604, 0.0
    %v701 = vmax.f32 %v609, 0.0
    %v702 = vmax.f32 %v612, 0.0
    %v703 = vmax.f32 %v617, 0.0
    %v704 = vmax.f32 %v620, 0.0
    %v705 = vmax.f32 %v625, 0.0
    %v706 = vmax.f32 %v628, 0.0
    %v707 = vmax.f32 %v633, 0.0
    %v708 = vmax.f32 %v636, 0.0
    %v709 = vmax.f32 %v641, 0.0
    %v710 = vmax.f32 %v644, 0.0
    %v711 = vpack.c.bf16 %v648, %v647
    %v712 = vpack.c.bf16 %v650, %v649
    %v713 = vpack.c.bf16 %v652, %v651
    %v714 = vpack.c.bf16 %v654, %v653
    %v715 = vpack.c.bf16 %v656, %v655
    %v716 = vpack.c.bf16 %v658, %v657
    %v717 = vpack.c.bf16 %v660, %v659
    %v718 = vpack.c.bf16 %v662, %v661
    %v719 = vpack.c.bf16 %v664, %v663
    %v720 = vpack.c.bf16 %v666, %v665
    %v721 = vpack.c.bf16 %v668, %v667
    %v722 = vpack.c.bf16 %v670, %v669
    %v723 = vpack.c.bf16 %v672, %v671
    %v724 = vpack.c.bf16 %v674, %v673
    %v725 = vpack.c.bf16 %v676, %v675
    %v726 = vpack.c.bf16 %v678, %v677
    %v727 = vpack.c.bf16 %v680, %v679
    %v728 = vpack.c.bf16 %v682, %v681
    %v729 = vpack.c.bf16 %v684, %v683
    %v730 = vpack.c.bf16 %v686, %v685
    %v731 = vpack.c.bf16 %v688, %v687
    %v732 = vpack.c.bf16 %v690, %v689
    %v733 = vpack.c.bf16 %v692, %v691
    %v734 = vpack.c.bf16 %v694, %v693
    %v735 = vpack.c.bf16 %v696, %v695
    %v736 = vpack.c.bf16 %v698, %v697
    %v737 = vpack.c.bf16 %v700, %v699
    %v738 = vpack.c.bf16 %v702, %v701
    %v739 = vpack.c.bf16 %v704, %v703
    %v740 = vpack.c.bf16 %v706, %v705
    %v741 = vpack.c.bf16 %v708, %v707
    %v742 = vpack.c.bf16 %v710, %v709
    %v743 = vld [vmem:[%s3] sm:$0xf]
    %v744 = vld [vmem:[%s3 + $0x4] sm:$0xf]
    %v745 = vld [vmem:[%s3 + $0x8] sm:$0xf]
    %v746 = vld [vmem:[%s3 + $0xc] sm:$0xf]
    %v747 = vld [vmem:[%s4] sm:$0x1]
    %v749 = vlaneseq
    %v750 = vshrl.u32 %v749, 7
    %v751 = vsub.s32 0, %v750
    %v752 = vrot.slane %v747, %v751
    %v758 = vunpack.c.l.b16 %v743
    %v759 = vunpack.c.l.b16 %v744
    %v760 = vunpack.c.l.b16 %v745
    %v761 = vunpack.c.l.b16 %v746
    %v762 = vpack.c.b16 %v759, %v758
    %v763 = vpack.c.b16 %v761, %v760
    %vm766 = vcmask 261120
    %v768 = vsel %vm766, %v711, 0
    %v771 = vsel %vm766, %v712, 0
    %v774 = vsel %vm766, %v713, 0
    %v777 = vsel %vm766, %v714, 0
    %v780 = vsel %vm766, %v715, 0
    %v783 = vsel %vm766, %v716, 0
    %v786 = vsel %vm766, %v717, 0
    %v789 = vsel %vm766, %v718, 0
    %v792 = vsel %vm766, %v719, 0
    %v795 = vsel %vm766, %v720, 0
    %v798 = vsel %vm766, %v721, 0
    %v801 = vsel %vm766, %v722, 0
    %v804 = vsel %vm766, %v723, 0
    %v807 = vsel %vm766, %v724, 0
    %v810 = vsel %vm766, %v725, 0
    %v813 = vsel %vm766, %v726, 0
    %v816 = vsel %vm766, %v727, 0
    %v819 = vsel %vm766, %v728, 0
    %v822 = vsel %vm766, %v729, 0
    %v825 = vsel %vm766, %v730, 0
    %v828 = vsel %vm766, %v731, 0
    %v831 = vsel %vm766, %v732, 0
    %v834 = vsel %vm766, %v733, 0
    %v837 = vsel %vm766, %v734, 0
    %v840 = vsel %vm766, %v735, 0
    %v843 = vsel %vm766, %v736, 0
    %v846 = vsel %vm766, %v737, 0
    %v849 = vsel %vm766, %v738, 0
    %v852 = vsel %vm766, %v739, 0
    %v855 = vsel %vm766, %v740, 0
    %v858 = vsel %vm766, %v741, 0
    %v861 = vsel %vm766, %v742, 0
    %863 = vmatprep.subr.bf16.mxu0 0
    %864 = vmatpush1.bf16.msra.mxu0 %v762
    %865 = vmatprep.subr.bf16.mxu0 0
    %866 = vmatpush1.bf16.msra.mxu0 %v763
    %867 = vmatprep.subr.bf16.mxu0 0
    %868 = vmatpush1.bf16.msra.mxu0 0
    %869 = vmatprep.subr.bf16.mxu0 0
    %870 = vmatpush1.bf16.msra.mxu0 0
    %871 = vmatprep.subr.bf16.mxu0 0
    %872 = vmatpush1.bf16.msra.mxu0 0
    %873 = vmatprep.subr.bf16.mxu0 0
    %874 = vmatpush1.bf16.msra.mxu0 0
    %875 = vmatprep.subr.bf16.mxu0 0
    %876 = vmatpush1.bf16.msra.mxu0 0
    %877 = vmatprep.subr.bf16.mxu0 0
    %878 = vmatpush1.bf16.msra.mxu0 0
    %879 = vmatprep.subr.bf16.mxu0 0
    %880 = vmatpush1.bf16.msra.mxu0 0
    %881 = vmatprep.subr.bf16.mxu0 0
    %882 = vmatpush1.bf16.msra.mxu0 0
    %883 = vmatprep.subr.bf16.mxu0 0
    %884 = vmatpush1.bf16.msra.mxu0 0
    %885 = vmatprep.subr.bf16.mxu0 0
    %886 = vmatpush1.bf16.msra.mxu0 0
    %887 = vmatprep.subr.bf16.mxu0 0
    %888 = vmatpush1.bf16.msra.mxu0 0
    %889 = vmatprep.subr.bf16.mxu0 0
    %890 = vmatpush1.bf16.msra.mxu0 0
    %891 = vmatprep.subr.bf16.mxu0 0
    %892 = vmatpush1.bf16.msra.mxu0 0
    %893 = vmatprep.subr.bf16.mxu0 0
    %894 = vmatpush1.bf16.msra.mxu0 0
    %895 = vmatprep.mubr.bf16.mxu0 0
    %896 = vmatmul.mubr.bf16.gmra.mrb[0].mxu0 %v768
    %v897 = vpop.f32.mrb[0].mxu0
    %v898 = vadd.f32 %v752, %v897
    %v899 = vpop.f32.mrb[0].mxu0
    %v900 = vpop.f32.mrb[0].mxu0
    %v901 = vadd.f32 %v752, %v900
    %v902 = vpop.f32.mrb[0].mxu0
    %903 = vmatprep.mubr.bf16.mxu0 0
    %904 = vmatmul.mubr.bf16.gmra.mrb[0].mxu0 %v771
    %v905 = vpop.f32.mrb[0].mxu0
    %v906 = vadd.f32 %v752, %v905
    %v907 = vpop.f32.mrb[0].mxu0
    %v908 = vpop.f32.mrb[0].mxu0
    %v909 = vadd.f32 %v752, %v908
    %v910 = vpop.f32.mrb[0].mxu0
    %911 = vmatprep.mubr.bf16.mxu0 0
    %912 = vmatmul.mubr.bf16.gmra.mrb[0].mxu0 %v774
    %v913 = vpop.f32.mrb[0].mxu0
    %v914 = vadd.f32 %v752, %v913
    %v915 = vpop.f32.mrb[0].mxu0
    %v916 = vpop.f32.mrb[0].mxu0
    %v917 = vadd.f32 %v752, %v916
    %v918 = vpop.f32.mrb[0].mxu0
    %919 = vmatprep.mubr.bf16.mxu0 0
    %920 = vmatmul.mubr.bf16.gmra.mrb[0].mxu0 %v777
    %v921 = vpop.f32.mrb[0].mxu0
    %v922 = vadd.f32 %v752, %v921
    %v923 = vpop.f32.mrb[0].mxu0
    %v924 = vpop.f32.mrb[0].mxu0
    %v925 = vadd.f32 %v752, %v924
    %v926 = vpop.f32.mrb[0].mxu0
    %927 = vmatprep.mubr.bf16.mxu0 0
    %928 = vmatmul.mubr.bf16.gmra.mrb[0].mxu0 %v780
    %v929 = vpop.f32.mrb[0].mxu0
    %v930 = vadd.f32 %v752, %v929
    %v931 = vpop.f32.mrb[0].mxu0
    %v932 = vpop.f32.mrb[0].mxu0
    %v933 = vadd.f32 %v752, %v932
    %v934 = vpop.f32.mrb[0].mxu0
    %935 = vmatprep.mubr.bf16.mxu0 0
    %936 = vmatmul.mubr.bf16.gmra.mrb[0].mxu0 %v783
    %v937 = vpop.f32.mrb[0].mxu0
    %v938 = vadd.f32 %v752, %v937
    %v939 = vpop.f32.mrb[0].mxu0
    %v940 = vpop.f32.mrb[0].mxu0
    %v941 = vadd.f32 %v752, %v940
    %v942 = vpop.f32.mrb[0].mxu0
    %943 = vmatprep.mubr.bf16.mxu0 0
    %944 = vmatmul.mubr.bf16.gmra.mrb[0].mxu0 %v786
    %v945 = vpop.f32.mrb[0].mxu0
    %v946 = vadd.f32 %v752, %v945
    %v947 = vpop.f32.mrb[0].mxu0
    %v948 = vpop.f32.mrb[0].mxu0
    %v949 = vadd.f32 %v752, %v948
    %v950 = vpop.f32.mrb[0].mxu0
    %951 = vmatprep.mubr.bf16.mxu0 0
    %952 = vmatmul.mubr.bf16.gmra.mrb[0].mxu0 %v789
    %v953 = vpop.f32.mrb[0].mxu0
    %v954 = vadd.f32 %v752, %v953
    %v955 = vpop.f32.mrb[0].mxu0
    %v956 = vpop.f32.mrb[0].mxu0
    %v957 = vadd.f32 %v752, %v956
    %v958 = vpop.f32.mrb[0].mxu0
    %959 = vmatprep.mubr.bf16.mxu0 0
    %960 = vmatmul.mubr.bf16.gmra.mrb[0].mxu0 %v792
    %v961 = vpop.f32.mrb[0].mxu0
    %v962 = vadd.f32 %v752, %v961
    %v963 = vpop.f32.mrb[0].mxu0
    %v964 = vpop.f32.mrb[0].mxu0
    %v965 = vadd.f32 %v752, %v964
    %v966 = vpop.f32.mrb[0].mxu0
    %967 = vmatprep.mubr.bf16.mxu0 0
    %968 = vmatmul.mubr.bf16.gmra.mrb[0].mxu0 %v795
    %v969 = vpop.f32.mrb[0].mxu0
    %v970 = vadd.f32 %v752, %v969
    %v971 = vpop.f32.mrb[0].mxu0
    %v972 = vpop.f32.mrb[0].mxu0
    %v973 = vadd.f32 %v752, %v972
    %v974 = vpop.f32.mrb[0].mxu0
    %975 = vmatprep.mubr.bf16.mxu0 0
    %976 = vmatmul.mubr.bf16.gmra.mrb[0].mxu0 %v798
    %v977 = vpop.f32.mrb[0].mxu0
    %v978 = vadd.f32 %v752, %v977
    %v979 = vpop.f32.mrb[0].mxu0
    %v980 = vpop.f32.mrb[0].mxu0
    %v981 = vadd.f32 %v752, %v980
    %v982 = vpop.f32.mrb[0].mxu0
    %983 = vmatprep.mubr.bf16.mxu0 0
    %984 = vmatmul.mubr.bf16.gmra.mrb[0].mxu0 %v801
    %v985 = vpop.f32.mrb[0].mxu0
    %v986 = vadd.f32 %v752, %v985
    %v987 = vpop.f32.mrb[0].mxu0
    %v988 = vpop.f32.mrb[0].mxu0
    %v989 = vadd.f32 %v752, %v988
    %v990 = vpop.f32.mrb[0].mxu0
    %991 = vmatprep.mubr.bf16.mxu0 0
    %992 = vmatmul.mubr.bf16.gmra.mrb[0].mxu0 %v804
    %v993 = vpop.f32.mrb[0].mxu0
    %v994 = vadd.f32 %v752, %v993
    %v995 = vpop.f32.mrb[0].mxu0
    %v996 = vpop.f32.mrb[0].mxu0
    %v997 = vadd.f32 %v752, %v996
    %v998 = vpop.f32.mrb[0].mxu0
    %999 = vmatprep.mubr.bf16.mxu0 0
    %1000 = vmatmul.mubr.bf16.gmra.mrb[0].mxu0 %v807
    %v1001 = vpop.f32.mrb[0].mxu0
    %v1002 = vadd.f32 %v752, %v1001
    %v1003 = vpop.f32.mrb[0].mxu0
    %v1004 = vpop.f32.mrb[0].mxu0
    %v1005 = vadd.f32 %v752, %v1004
    %v1006 = vpop.f32.mrb[0].mxu0
    %1007 = vmatprep.mubr.bf16.mxu0 0
    %1008 = vmatmul.mubr.bf16.gmra.mrb[0].mxu0 %v810
    %v1009 = vpop.f32.mrb[0].mxu0
    %v1010 = vadd.f32 %v752, %v1009
    %v1011 = vpop.f32.mrb[0].mxu0
    %v1012 = vpop.f32.mrb[0].mxu0
    %v1013 = vadd.f32 %v752, %v1012
    %v1014 = vpop.f32.mrb[0].mxu0
    %1015 = vmatprep.mubr.bf16.mxu0 0
    %1016 = vmatmul.mubr.bf16.gmra.mrb[0].mxu0 %v813
    %v1017 = vpop.f32.mrb[0].mxu0
    %v1018 = vadd.f32 %v752, %v1017
    %v1019 = vpop.f32.mrb[0].mxu0
    %v1020 = vpop.f32.mrb[0].mxu0
    %v1021 = vadd.f32 %v752, %v1020
    %v1022 = vpop.f32.mrb[0].mxu0
    %1023 = vmatprep.mubr.bf16.mxu0 0
    %1024 = vmatmul.mubr.bf16.gmra.mrb[0].mxu0 %v816
    %v1025 = vpop.f32.mrb[0].mxu0
    %v1026 = vadd.f32 %v752, %v1025
    %v1027 = vpop.f32.mrb[0].mxu0
    %v1028 = vpop.f32.mrb[0].mxu0
    %v1029 = vadd.f32 %v752, %v1028
    %v1030 = vpop.f32.mrb[0].mxu0
    %1031 = vmatprep.mubr.bf16.mxu0 0
    %1032 = vmatmul.mubr.bf16.gmra.mrb[0].mxu0 %v819
    %v1033 = vpop.f32.mrb[0].mxu0
    %v1034 = vadd.f32 %v752, %v1033
    %v1035 = vpop.f32.mrb[0].mxu0
    %v1036 = vpop.f32.mrb[0].mxu0
    %v1037 = vadd.f32 %v752, %v1036
    %v1038 = vpop.f32.mrb[0].mxu0
    %1039 = vmatprep.mubr.bf16.mxu0 0
    %1040 = vmatmul.mubr.bf16.gmra.mrb[0].mxu0 %v822
    %v1041 = vpop.f32.mrb[0].mxu0
    %v1042 = vadd.f32 %v752, %v1041
    %v1043 = vpop.f32.mrb[0].mxu0
    %v1044 = vpop.f32.mrb[0].mxu0
    %v1045 = vadd.f32 %v752, %v1044
    %v1046 = vpop.f32.mrb[0].mxu0
    %1047 = vmatprep.mubr.bf16.mxu0 0
    %1048 = vmatmul.mubr.bf16.gmra.mrb[0].mxu0 %v825
    %v1049 = vpop.f32.mrb[0].mxu0
    %v1050 = vadd.f32 %v752, %v1049
    %v1051 = vpop.f32.mrb[0].mxu0
    %v1052 = vpop.f32.mrb[0].mxu0
    %v1053 = vadd.f32 %v752, %v1052
    %v1054 = vpop.f32.mrb[0].mxu0
    %1055 = vmatprep.mubr.bf16.mxu0 0
    %1056 = vmatmul.mubr.bf16.gmra.mrb[0].mxu0 %v828
    %v1057 = vpop.f32.mrb[0].mxu0
    %v1058 = vadd.f32 %v752, %v1057
    %v1059 = vpop.f32.mrb[0].mxu0
    %v1060 = vpop.f32.mrb[0].mxu0
    %v1061 = vadd.f32 %v752, %v1060
    %v1062 = vpop.f32.mrb[0].mxu0
    %1063 = vmatprep.mubr.bf16.mxu0 0
    %1064 = vmatmul.mubr.bf16.gmra.mrb[0].mxu0 %v831
    %v1065 = vpop.f32.mrb[0].mxu0
    %v1066 = vadd.f32 %v752, %v1065
    %v1067 = vpop.f32.mrb[0].mxu0
    %v1068 = vpop.f32.mrb[0].mxu0
    %v1069 = vadd.f32 %v752, %v1068
    %v1070 = vpop.f32.mrb[0].mxu0
    %1071 = vmatprep.mubr.bf16.mxu0 0
    %1072 = vmatmul.mubr.bf16.gmra.mrb[0].mxu0 %v834
    %v1073 = vpop.f32.mrb[0].mxu0
    %v1074 = vadd.f32 %v752, %v1073
    %v1075 = vpop.f32.mrb[0].mxu0
    %v1076 = vpop.f32.mrb[0].mxu0
    %v1077 = vadd.f32 %v752, %v1076
    %v1078 = vpop.f32.mrb[0].mxu0
    %1079 = vmatprep.mubr.bf16.mxu0 0
    %1080 = vmatmul.mubr.bf16.gmra.mrb[0].mxu0 %v837
    %v1081 = vpop.f32.mrb[0].mxu0
    %v1082 = vadd.f32 %v752, %v1081
    %v1083 = vpop.f32.mrb[0].mxu0
    %v1084 = vpop.f32.mrb[0].mxu0
    %v1085 = vadd.f32 %v752, %v1084
    %v1086 = vpop.f32.mrb[0].mxu0
    %1087 = vmatprep.mubr.bf16.mxu0 0
    %1088 = vmatmul.mubr.bf16.gmra.mrb[0].mxu0 %v840
    %v1089 = vpop.f32.mrb[0].mxu0
    %v1090 = vadd.f32 %v752, %v1089
    %v1091 = vpop.f32.mrb[0].mxu0
    %v1092 = vpop.f32.mrb[0].mxu0
    %v1093 = vadd.f32 %v752, %v1092
    %v1094 = vpop.f32.mrb[0].mxu0
    %1095 = vmatprep.mubr.bf16.mxu0 0
    %1096 = vmatmul.mubr.bf16.gmra.mrb[0].mxu0 %v843
    %v1097 = vpop.f32.mrb[0].mxu0
    %v1098 = vadd.f32 %v752, %v1097
    %v1099 = vpop.f32.mrb[0].mxu0
    %v1100 = vpop.f32.mrb[0].mxu0
    %v1101 = vadd.f32 %v752, %v1100
    %v1102 = vpop.f32.mrb[0].mxu0
    %1103 = vmatprep.mubr.bf16.mxu0 0
    %1104 = vmatmul.mubr.bf16.gmra.mrb[0].mxu0 %v846
    %v1105 = vpop.f32.mrb[0].mxu0
    %v1106 = vadd.f32 %v752, %v1105
    %v1107 = vpop.f32.mrb[0].mxu0
    %v1108 = vpop.f32.mrb[0].mxu0
    %v1109 = vadd.f32 %v752, %v1108
    %v1110 = vpop.f32.mrb[0].mxu0
    %1111 = vmatprep.mubr.bf16.mxu0 0
    %1112 = vmatmul.mubr.bf16.gmra.mrb[0].mxu0 %v849
    %v1113 = vpop.f32.mrb[0].mxu0
    %v1114 = vadd.f32 %v752, %v1113
    %v1115 = vpop.f32.mrb[0].mxu0
    %v1116 = vpop.f32.mrb[0].mxu0
    %v1117 = vadd.f32 %v752, %v1116
    %v1118 = vpop.f32.mrb[0].mxu0
    %1119 = vmatprep.mubr.bf16.mxu0 0
    %1120 = vmatmul.mubr.bf16.gmra.mrb[0].mxu0 %v852
    %v1121 = vpop.f32.mrb[0].mxu0
    %v1122 = vadd.f32 %v752, %v1121
    %v1123 = vpop.f32.mrb[0].mxu0
    %v1124 = vpop.f32.mrb[0].mxu0
    %v1125 = vadd.f32 %v752, %v1124
    %v1126 = vpop.f32.mrb[0].mxu0
    %1127 = vmatprep.mubr.bf16.mxu0 0
    %1128 = vmatmul.mubr.bf16.gmra.mrb[0].mxu0 %v855
    %v1129 = vpop.f32.mrb[0].mxu0
    %v1130 = vadd.f32 %v752, %v1129
    %v1131 = vpop.f32.mrb[0].mxu0
    %v1132 = vpop.f32.mrb[0].mxu0
    %v1133 = vadd.f32 %v752, %v1132
    %v1134 = vpop.f32.mrb[0].mxu0
    %1135 = vmatprep.mubr.bf16.mxu0 0
    %1136 = vmatmul.mubr.bf16.gmra.mrb[0].mxu0 %v858
    %v1137 = vpop.f32.mrb[0].mxu0
    %v1138 = vadd.f32 %v752, %v1137
    %v1139 = vpop.f32.mrb[0].mxu0
    %v1140 = vpop.f32.mrb[0].mxu0
    %v1141 = vadd.f32 %v752, %v1140
    %v1142 = vpop.f32.mrb[0].mxu0
    %1143 = vmatprep.mubr.bf16.mxu0 0
    %1144 = vmatmul.mubr.bf16.gmra.mrb[0].mxu0 %v861
    %v1145 = vpop.f32.mrb[0].mxu0
    %v1146 = vadd.f32 %v752, %v1145
    %v1147 = vpop.f32.mrb[0].mxu0
    %v1148 = vpop.f32.mrb[0].mxu0
    %v1149 = vadd.f32 %v752, %v1148
    %v1150 = vpop.f32.mrb[0].mxu0
    %1151 = vdwg.mxu0
    %v1152 = vmax.f32 %v898, %v901
    %v1153 = vmax.f32 %v1152, %v906
    %v1154 = vmax.f32 %v1153, %v909
    %v1155 = vrot.slane %v1154, 4
    %v1156 = vmax.f32 %v1154, %v1155
    %v1157 = vrot.slane %v1156, 2
    %v1158 = vmax.f32 %v1156, %v1157
    %v1159 = vrot.slane %v1158, 1
    %v1160 = vmax.f32 %v1158, %v1159
    %v1161 = vmax.f32 %v914, %v917
    %v1162 = vmax.f32 %v1161, %v922
    %v1163 = vmax.f32 %v1162, %v925
    %v1164 = vrot.slane %v1163, 4
    %v1165 = vmax.f32 %v1163, %v1164
    %v1166 = vrot.slane %v1165, 2
    %v1167 = vmax.f32 %v1165, %v1166
    %v1168 = vrot.slane %v1167, 1
    %v1169 = vmax.f32 %v1167, %v1168
    %v1170 = vmax.f32 %v930, %v933
    %v1171 = vmax.f32 %v1170, %v938
    %v1172 = vmax.f32 %v1171, %v941
    %v1173 = vrot.slane %v1172, 4
    %v1174 = vmax.f32 %v1172, %v1173
    %v1175 = vrot.slane %v1174, 2
    %v1176 = vmax.f32 %v1174, %v1175
    %v1177 = vrot.slane %v1176, 1
    %v1178 = vmax.f32 %v1176, %v1177
    %v1179 = vmax.f32 %v946, %v949
    %v1180 = vmax.f32 %v1179, %v954
    %v1181 = vmax.f32 %v1180, %v957
    %v1182 = vrot.slane %v1181, 4
    %v1183 = vmax.f32 %v1181, %v1182
    %v1184 = vrot.slane %v1183, 2
    %v1185 = vmax.f32 %v1183, %v1184
    %v1186 = vrot.slane %v1185, 1
    %v1187 = vmax.f32 %v1185, %v1186
    %v1188 = vmax.f32 %v962, %v965
    %v1189 = vmax.f32 %v1188, %v970
    %v1190 = vmax.f32 %v1189, %v973
    %v1191 = vrot.slane %v1190, 4
    %v1192 = vmax.f32 %v1190, %v1191
    %v1193 = vrot.slane %v1192, 2
    %v1194 = vmax.f32 %v1192, %v1193
    %v1195 = vrot.slane %v1194, 1
    %v1196 = vmax.f32 %v1194, %v1195
    %v1197 = vmax.f32 %v978, %v981
    %v1198 = vmax.f32 %v1197, %v986
    %v1199 = vmax.f32 %v1198, %v989
    %v1200 = vrot.slane %v1199, 4
    %v1201 = vmax.f32 %v1199, %v1200
    %v1202 = vrot.slane %v1201, 2
    %v1203 = vmax.f32 %v1201, %v1202
    %v1204 = vrot.slane %v1203, 1
    %v1205 = vmax.f32 %v1203, %v1204
    %v1206 = vmax.f32 %v994, %v997
    %v1207 = vmax.f32 %v1206, %v1002
    %v1208 = vmax.f32 %v1207, %v1005
    %v1209 = vrot.slane %v1208, 4
    %v1210 = vmax.f32 %v1208, %v1209
    %v1211 = vrot.slane %v1210, 2
    %v1212 = vmax.f32 %v1210, %v1211
    %v1213 = vrot.slane %v1212, 1
    %v1214 = vmax.f32 %v1212, %v1213
    %v1215 = vmax.f32 %v1010, %v1013
    %v1216 = vmax.f32 %v1215, %v1018
    %v1217 = vmax.f32 %v1216, %v1021
    %v1218 = vrot.slane %v1217, 4
    %v1219 = vmax.f32 %v1217, %v1218
    %v1220 = vrot.slane %v1219, 2
    %v1221 = vmax.f32 %v1219, %v1220
    %v1222 = vrot.slane %v1221, 1
    %v1223 = vmax.f32 %v1221, %v1222
    %v1224 = vmax.f32 %v1026, %v1029
    %v1225 = vmax.f32 %v1224, %v1034
    %v1226 = vmax.f32 %v1225, %v1037
    %v1227 = vrot.slane %v1226, 4
    %v1228 = vmax.f32 %v1226, %v1227
    %v1229 = vrot.slane %v1228, 2
    %v1230 = vmax.f32 %v1228, %v1229
    %v1231 = vrot.slane %v1230, 1
    %v1232 = vmax.f32 %v1230, %v1231
    %v1233 = vmax.f32 %v1042, %v1045
    %v1234 = vmax.f32 %v1233, %v1050
    %v1235 = vmax.f32 %v1234, %v1053
    %v1236 = vrot.slane %v1235, 4
    %v1237 = vmax.f32 %v1235, %v1236
    %v1238 = vrot.slane %v1237, 2
    %v1239 = vmax.f32 %v1237, %v1238
    %v1240 = vrot.slane %v1239, 1
    %v1241 = vmax.f32 %v1239, %v1240
    %v1242 = vmax.f32 %v1058, %v1061
    %v1243 = vmax.f32 %v1242, %v1066
    %v1244 = vmax.f32 %v1243, %v1069
    %v1245 = vrot.slane %v1244, 4
    %v1246 = vmax.f32 %v1244, %v1245
    %v1247 = vrot.slane %v1246, 2
    %v1248 = vmax.f32 %v1246, %v1247
    %v1249 = vrot.slane %v1248, 1
    %v1250 = vmax.f32 %v1248, %v1249
    %v1251 = vmax.f32 %v1074, %v1077
    %v1252 = vmax.f32 %v1251, %v1082
    %v1253 = vmax.f32 %v1252, %v1085
    %v1254 = vrot.slane %v1253, 4
    %v1255 = vmax.f32 %v1253, %v1254
    %v1256 = vrot.slane %v1255, 2
    %v1257 = vmax.f32 %v1255, %v1256
    %v1258 = vrot.slane %v1257, 1
    %v1259 = vmax.f32 %v1257, %v1258
    %v1260 = vmax.f32 %v1090, %v1093
    %v1261 = vmax.f32 %v1260, %v1098
    %v1262 = vmax.f32 %v1261, %v1101
    %v1263 = vrot.slane %v1262, 4
    %v1264 = vmax.f32 %v1262, %v1263
    %v1265 = vrot.slane %v1264, 2
    %v1266 = vmax.f32 %v1264, %v1265
    %v1267 = vrot.slane %v1266, 1
    %v1268 = vmax.f32 %v1266, %v1267
    %v1269 = vmax.f32 %v1106, %v1109
    %v1270 = vmax.f32 %v1269, %v1114
    %v1271 = vmax.f32 %v1270, %v1117
    %v1272 = vrot.slane %v1271, 4
    %v1273 = vmax.f32 %v1271, %v1272
    %v1274 = vrot.slane %v1273, 2
    %v1275 = vmax.f32 %v1273, %v1274
    %v1276 = vrot.slane %v1275, 1
    %v1277 = vmax.f32 %v1275, %v1276
    %v1278 = vmax.f32 %v1122, %v1125
    %v1279 = vmax.f32 %v1278, %v1130
    %v1280 = vmax.f32 %v1279, %v1133
    %v1281 = vrot.slane %v1280, 4
    %v1282 = vmax.f32 %v1280, %v1281
    %v1283 = vrot.slane %v1282, 2
    %v1284 = vmax.f32 %v1282, %v1283
    %v1285 = vrot.slane %v1284, 1
    %v1286 = vmax.f32 %v1284, %v1285
    %v1287 = vmax.f32 %v1138, %v1141
    %v1288 = vmax.f32 %v1287, %v1146
    %v1289 = vmax.f32 %v1288, %v1149
    %v1290 = vrot.slane %v1289, 4
    %v1291 = vmax.f32 %v1289, %v1290
    %v1292 = vrot.slane %v1291, 2
    %v1293 = vmax.f32 %v1291, %v1292
    %v1294 = vrot.slane %v1293, 1
    %v1295 = vmax.f32 %v1293, %v1294
    %p1296 = scmp.eq.s32.totalorder 0, 0
    // Predicated region
    $region22: #{tpu_custom_call.1} parent=1 // pred_check
      %p1297 = pneg %p1296
    $region23: #{tpu_custom_call.1} parent=1 // pred_check_branch
      %1299 = sbr.rel (%p1297) target = $region25
    $region24: #{tpu_custom_call.1} parent=1 // pred_region
      %vm1316 = vcmask 1041409
      %v1317 = vsel %vm1316, %v1169, %v1160
      %vm1318 = vcmask 1042434
      %v1319 = vsel %vm1318, %v1178, %v1317
      %vm1320 = vcmask 1043459
      %v1321 = vsel %vm1320, %v1187, %v1319
      %vm1322 = vcmask 1044484
      %v1323 = vsel %vm1322, %v1196, %v1321
      %vm1324 = vcmask 1045509
      %v1325 = vsel %vm1324, %v1205, %v1323
      %vm1326 = vcmask 1046534
      %v1327 = vsel %vm1326, %v1214, %v1325
      %vm1328 = vcmask 1047559
      %v1329 = vsel %vm1328, %v1223, %v1327
      %v1330 = vsel %vm1316, %v1241, %v1232
      %v1331 = vsel %vm1318, %v1250, %v1330
      %v1332 = vsel %vm1320, %v1259, %v1331
      %v1333 = vsel %vm1322, %v1268, %v1332
      %v1334 = vsel %vm1324, %v1277, %v1333
      %v1335 = vsel %vm1326, %v1286, %v1334
      %v1336 = vsel %vm1328, %v1295, %v1335
      %1339 = vst [vmem:[#allocation2] sm:$0xff] %v1329
      %1340 = vst [vmem:[#allocation2 + $0x8] sm:$0xff] %v1336
    $region25: #{tpu_custom_call.1} parent=1 // pred_fallthru
      _
    %p1341 = scmp.gt.s32.totalorder 0, 0
    // Predicated region
    $region26: #{tpu_custom_call.1} parent=1 // pred_check
      %p1342 = pneg %p1341
    $region27: #{tpu_custom_call.1} parent=1 // pred_check_branch
      %1344 = sbr.rel (%p1342) target = $region29
    $region28: #{tpu_custom_call.1} parent=1 // pred_region
      %v1345 = vld [vmem:[#allocation2] sm:$0xff]
      %v1346 = vld [vmem:[#allocation2 + $0x8] sm:$0xff]
      %vm1363 = vcmask 1041409
      %v1364 = vsel %vm1363, %v1169, %v1160
      %vm1365 = vcmask 1042434
      %v1366 = vsel %vm1365, %v1178, %v1364
      %vm1367 = vcmask 1043459
      %v1368 = vsel %vm1367, %v1187, %v1366
      %vm1369 = vcmask 1044484
      %v1370 = vsel %vm1369, %v1196, %v1368
      %vm1371 = vcmask 1045509
      %v1372 = vsel %vm1371, %v1205, %v1370
      %vm1373 = vcmask 1046534
      %v1374 = vsel %vm1373, %v1214, %v1372
      %vm1375 = vcmask 1047559
      %v1376 = vsel %vm1375, %v1223, %v1374
      %v1377 = vsel %vm1363, %v1241, %v1232
      %v1378 = vsel %vm1365, %v1250, %v1377
      %v1379 = vsel %vm1367, %v1259, %v1378
      %v1380 = vsel %vm1369, %v1268, %v1379
      %v1381 = vsel %vm1371, %v1277, %v1380
      %v1382 = vsel %vm1373, %v1286, %v1381
      %v1383 = vsel %vm1375, %v1295, %v1382
      %v1386 = vmax.f32 %v1345, %v1376
      %v1387 = vmax.f32 %v1346, %v1383
      %1388 = vst [vmem:[#allocation2] sm:$0xff] %v1386
      %1389 = vst [vmem:[#allocation2 + $0x8] sm:$0xff] %v1387
    $region29: #{tpu_custom_call.1} parent=1 // pred_fallthru
      _
    // Predicated region
    $region30: #{tpu_custom_call.1} parent=1 // pred_check
      _
    $region31: #{tpu_custom_call.1} parent=1 // pred_check_branch
      %1391 = sbr.rel (0) target = $region33
    $region32: #{tpu_custom_call.1} parent=1 // pred_region
      %s1393 = ssub.s32 256, 256
      %1394 = vsyncadd [#allocation3], %s1393
      %s1395 = sshll.u32 [#allocation2], 4
      %s1396 = int_to_ptr.vmem [resolvable:$true] %s1395
      %1401 = dma.vmem_to_hbm [thread:$0]  %s1396, 256, %s5, [#allocation3], 128, 128, 8
    $region33: #{tpu_custom_call.1} parent=1 // pred_fallthru
      _
    // Predicated region
    $region34: #{tpu_custom_call.1} parent=1 // pred_check
      _
    $region35: #{tpu_custom_call.1} parent=1 // pred_check_branch
      %1403 = sbr.rel (0) target = $region37
    $region36: #{tpu_custom_call.1} parent=1 // pred_region
      %1404 = dma.done [#allocation3], 256
    $region37: #{tpu_custom_call.1} parent=1 // pred_fallthru
      _
    %1405 = vsyncpa [#allocation3], 1

</llo_original>
